<compile_context>
chip_gen: v7x
topology: tpu7x:2x2x1
jax: 0.10.0
libtpu: 0.0.40
codegen_flags: <defaults>
</compile_context>

<pallas_src>
import math
import functools

import jax
import jax.numpy as jnp
from jax.experimental import pallas as pl
from jax.experimental.pallas import tpu as pltpu


def _round_up(a: int, b: int) -> int:
    return (a + b - 1) // b * b


def _gcn_kernel(adj_ref, x_ref, w_ref, b_ref, o_ref, acc_ref):
    """One (row-tile i, contraction-tile k) step of out = (adj @ x) @ w + b."""
    k = pl.program_id(1)

    @pl.when(k == 0)
    def _init():
        acc_ref[...] = jnp.zeros_like(acc_ref)

    # Accumulate adj_tile[tm, tk] @ x_tile[tk, F_in] in float32 on the MXU.
    acc_ref[...] += jnp.dot(adj_ref[...], x_ref[...],
                            preferred_element_type=jnp.float32)

    @pl.when(k == pl.num_programs(1) - 1)
    def _finalize():
        # Epilogue: [tm, F_in] @ [F_in, F_out] on the MXU, bias add in f32.
        ax = acc_ref[...].astype(w_ref.dtype)
        out = jnp.dot(ax, w_ref[...], preferred_element_type=jnp.float32)
        o_ref[...] = (out + b_ref[...]).astype(o_ref.dtype)


@functools.partial(jax.jit, static_argnames=("tm", "tk", "compute_dtype"))
def graph_convolution(x, adj, weight, bias=None, *, tm=256, tk=512,
                      compute_dtype=None):
    """GCN forward: adj @ (x @ weight) + bias, computed as (adj @ x) @ weight.

    x: [N, F_in], adj: [N, N] (dense), weight: [F_in, F_out], bias: [F_out]|None.
    compute_dtype: optional dtype (e.g. jnp.bfloat16) for the matmul operands;
                   accumulation, bias add and the output stay float32.
    """
    N, f_in = x.shape
    f_out = weight.shape[1]
    out_dtype = x.dtype

    if bias is None:
        bias = jnp.zeros((f_out,), jnp.float32)
    bias2d = bias.astype(jnp.float32).reshape(1, f_out)

    if compute_dtype is not None:
        x = x.astype(compute_dtype)
        adj = adj.astype(compute_dtype)
        weight = weight.astype(compute_dtype)

    # Hardware-aligned tile sizes, clamped to the (padded) problem size.
    #   tm: output / adj row tile (sublane axis -> multiple of 8)
    #   tk: contraction tile over adj columns (lane axis -> multiple of 128)
    tm = _round_up(max(8, min(tm, _round_up(N, 8))), 8)
    tk = _round_up(max(128, min(tk, _round_up(N, 128))), 128)
    n_rows = _round_up(N, tm)
    n_cols = _round_up(N, tk)

    # Zero-pad so the padded contraction tail adds exactly 0 to the accumulator
    # and padded output rows are simply sliced off.
    adj_p = jnp.pad(adj, ((0, n_rows - N), (0, n_cols - N)))
    x_p = jnp.pad(x, ((0, n_cols - N), (0, 0)))

    grid = (n_rows // tm, n_cols // tk)

    # Rough VMEM working-set estimate (double-buffered pipelined operands).
    # NOTE(v7x): weight/bias could be single-buffered via pipeline_mode=
    # pl.Buffered(1) to save VMEM; omitted here to keep lowering conservative.
    in_bytes = jnp.dtype(x.dtype).itemsize
    w_bytes = jnp.dtype(weight.dtype).itemsize
    est = (2 * tm * tk * in_bytes            # adj tile
           + 2 * tk * f_in * in_bytes        # x tile
           + 2 * f_in * f_out * w_bytes      # weight (resident)
           + 2 * f_out * 4                   # bias (resident)
           + 2 * tm * f_out * 4              # output tile
           + tm * f_in * 4)                  # accumulator scratch
    vmem_limit = max(32 * 1024 * 1024, int(1.5 * est))

    out_p = pl.pallas_call(
        _gcn_kernel,
        out_shape=jax.ShapeDtypeStruct((n_rows, f_out), out_dtype),
        grid_spec=pltpu.PrefetchScalarGridSpec(
            num_scalar_prefetch=0,
            grid=grid,
            in_specs=[
                pl.BlockSpec((tm, tk), lambda i, k: (i, k)),        # adj tile
                pl.BlockSpec((tk, f_in), lambda i, k: (k, 0)),      # x tile
                pl.BlockSpec((f_in, f_out), lambda i, k: (0, 0)),   # weight
                pl.BlockSpec((1, f_out), lambda i, k: (0, 0)),      # bias
            ],
            out_specs=pl.BlockSpec((tm, f_out), lambda i, k: (i, 0)),
            scratch_shapes=[pltpu.VMEM((tm, f_in), jnp.float32)],
        ),
        compiler_params=pltpu.CompilerParams(
            dimension_semantics=("parallel", "arbitrary"),
            vmem_limit_bytes=vmem_limit,
        ),
    )(adj_p, x_p, weight, bias2d)

    return out_p[:N]


def graph_convolution_ref(x, adj, weight, bias):
    out = adj @ (x @ weight)
    if bias is not None:
        out = out + bias[None, :]
    return out


if __name__ == "__main__":
    # Small deterministic problem: N=256 nodes, F_in=64 -> F_out=128.
    N, F_IN, F_OUT = 256, 64, 128
    key = jax.random.PRNGKey(0)
    k_x, k_adj, k_w, k_b = jax.random.split(key, 4)

    x = jax.random.normal(k_x, (N, F_IN), dtype=jnp.float32)

    # Random symmetric, row-normalised adjacency (dense stand-in for spmm).
    a = (jax.random.uniform(k_adj, (N, N)) < 0.05).astype(jnp.float32)
    a = jnp.maximum(a, a.T) + jnp.eye(N, dtype=jnp.float32)
    adj = a / jnp.sum(a, axis=1, keepdims=True)

    # Parameter init matching reset_parameters(): uniform(-stdv, stdv),
    # stdv = 1/sqrt(out_features).
    stdv = 1.0 / math.sqrt(F_OUT)
    weight = jax.random.uniform(k_w, (F_IN, F_OUT), jnp.float32, -stdv, stdv)
    bias = jax.random.uniform(k_b, (F_OUT,), jnp.float32, -stdv, stdv)

    ref = graph_convolution_ref(x, adj, weight, bias)

    # f32 path: tm=128 keeps 2 parallel row tiles at N=256 (v7x: one per TC);
    # on v5e/v6e the extra grid step costs ~0.35 us.
    out = graph_convolution(x, adj, weight, bias, tm=128, tk=256)
    out = jax.block_until_ready(out)
    assert out.shape == (N, F_OUT)
    assert jnp.allclose(out, ref, atol=1e-4, rtol=1e-4), "f32 mismatch vs reference"

    # bf16 MXU path (native v5e/v6e/v7x matmul throughput, f32 accumulate).
    out_bf16 = graph_convolution(x, adj, weight, bias, tm=128, tk=256,
                                 compute_dtype=jnp.bfloat16)
    out_bf16 = jax.block_until_ready(out_bf16)
    assert jnp.allclose(out_bf16, ref, atol=2e-2, rtol=2e-2), "bf16 mismatch vs reference"

    print("KERNEL_OK")
</pallas_src>

<mosaic_0001>
module attributes {stable_mosaic.version = 11 : i64} {
  func.func @_gcn_kernel(%arg0: i32, %arg1: i32, %arg2: memref<128x256xf32, #tpu.memory_space<vmem>>, %arg3: memref<256x64xf32, #tpu.memory_space<vmem>>, %arg4: memref<64x128xf32, #tpu.memory_space<vmem>>, %arg5: memref<1x128xf32, #tpu.memory_space<vmem>>, %arg6: memref<128x128xf32, #tpu.memory_space<vmem>>, %arg7: memref<128x64xf32, #tpu.memory_space<vmem>>) attributes {dimension_semantics = [#tpu.dimension_semantics<parallel>, #tpu.dimension_semantics<arbitrary>], iteration_bounds = array<i64: 2, 1>, scalar_prefetch = 0 : i64, scratch_operands = 1 : i64, tpu.core_type = #tpu.core_type<tc>, window_params = [{transform_indices = @transform_0, window_bounds = array<i64: 128, 256>}, {transform_indices = @transform_1, window_bounds = array<i64: 256, 64>}, {pipeline_mode = #tpu.pipeline_mode<synchronous>, transform_indices = @transform_2, window_bounds = array<i64: 64, 128>}, {pipeline_mode = #tpu.pipeline_mode<synchronous>, transform_indices = @transform_3, window_bounds = array<i64: 1, 128>}, {transform_indices = @transform_4, window_bounds = array<i64: 128, 128>}]} {
    %c0_i32 = arith.constant 0 : i32
    %0 = arith.cmpi eq, %arg1, %c0_i32 : i32
    %1 = arith.extui %0 : i1 to i32
    %c0_i32_0 = arith.constant 0 : i32
    %2 = arith.cmpi ne, %1, %c0_i32_0 : i32
    scf.if %2 {
      %cst_10 = arith.constant 0.000000e+00 : f32
      %12 = vector.broadcast %cst_10 : f32 to vector<128x64xf32>
      %c0_11 = arith.constant 0 : index
      %c0_12 = arith.constant 0 : index
      %13 = vector.load %arg7[%c0_11, %c0_12] : memref<128x64xf32, #tpu.memory_space<vmem>>, vector<128x64xf32>
      tpu.vector_store %arg7[%c0_11, %c0_12], %12 {strides = array<i32>} : memref<128x64xf32, #tpu.memory_space<vmem>>, vector<128x64xf32>,
    } else {
    }
    %c0 = arith.constant 0 : index
    %c0_1 = arith.constant 0 : index
    %3 = vector.load %arg7[%c0, %c0_1] : memref<128x64xf32, #tpu.memory_space<vmem>>, vector<128x64xf32>
    %c0_2 = arith.constant 0 : index
    %c0_3 = arith.constant 0 : index
    %4 = vector.load %arg2[%c0_2, %c0_3] : memref<128x256xf32, #tpu.memory_space<vmem>>, vector<128x256xf32>
    %c0_4 = arith.constant 0 : index
    %c0_5 = arith.constant 0 : index
    %5 = vector.load %arg3[%c0_4, %c0_5] : memref<256x64xf32, #tpu.memory_space<vmem>>, vector<256x64xf32>
    %cst = arith.constant dense<0.000000e+00> : vector<128x64xf32>
    %6 = tpu.matmul %4, %5, %cst {dimension_numbers = #tpu.dot_dimension_numbers<[1], [0], [0], [1], [0, 0, 1, 1], [], []>} : vector<128x256xf32>, vector<256x64xf32>, vector<128x64xf32> -> vector<128x64xf32>
    %7 = arith.addf %3, %6 : vector<128x64xf32>
    %c0_6 = arith.constant 0 : index
    %c0_7 = arith.constant 0 : index
    %8 = vector.load %arg7[%c0_6, %c0_7] : memref<128x64xf32, #tpu.memory_space<vmem>>, vector<128x64xf32>
    tpu.vector_store %arg7[%c0_6, %c0_7], %7 {strides = array<i32>} : memref<128x64xf32, #tpu.memory_space<vmem>>, vector<128x64xf32>,
    %c0_i32_8 = arith.constant 0 : i32
    %9 = arith.cmpi eq, %arg1, %c0_i32_8 : i32
    %10 = arith.extui %9 : i1 to i32
    %c0_i32_9 = arith.constant 0 : i32
    %11 = arith.cmpi ne, %10, %c0_i32_9 : i32
    scf.if %11 {
      %c0_10 = arith.constant 0 : index
      %c0_11 = arith.constant 0 : index
      %12 = vector.load %arg7[%c0_10, %c0_11] : memref<128x64xf32, #tpu.memory_space<vmem>>, vector<128x64xf32>
      %c0_12 = arith.constant 0 : index
      %c0_13 = arith.constant 0 : index
      %13 = vector.load %arg4[%c0_12, %c0_13] : memref<64x128xf32, #tpu.memory_space<vmem>>, vector<64x128xf32>
      %cst_14 = arith.constant dense<0.000000e+00> : vector<128x128xf32>
      %14 = tpu.matmul %12, %13, %cst_14 {dimension_numbers = #tpu.dot_dimension_numbers<[1], [0], [0], [1], [0, 0, 1, 1], [], []>} : vector<128x64xf32>, vector<64x128xf32>, vector<128x128xf32> -> vector<128x128xf32>
      %c0_15 = arith.constant 0 : index
      %c0_16 = arith.constant 0 : index
      %15 = vector.load %arg5[%c0_15, %c0_16] : memref<1x128xf32, #tpu.memory_space<vmem>>, vector<1x128xf32>
      %16 = vector.broadcast %15 : vector<1x128xf32> to vector<128x128xf32>
      %17 = arith.addf %14, %16 : vector<128x128xf32>
      %c0_17 = arith.constant 0 : index
      %c0_18 = arith.constant 0 : index
      %18 = vector.load %arg6[%c0_17, %c0_18] : memref<128x128xf32, #tpu.memory_space<vmem>>, vector<128x128xf32>
      tpu.vector_store %arg6[%c0_17, %c0_18], %17 {strides = array<i32>} : memref<128x128xf32, #tpu.memory_space<vmem>>, vector<128x128xf32>,
    } else {
    }
    return
  }
  func.func @transform_0(%arg0: i32, %arg1: i32) -> (i32, i32) {
    %c0_i32 = arith.constant 0 : i32
    return %arg0, %arg1 : i32, i32
  }
  func.func @transform_1(%arg0: i32, %arg1: i32) -> (i32, i32) {
    %c0_i32 = arith.constant 0 : i32
    %c0_i32_0 = arith.constant 0 : i32
    return %arg1, %c0_i32 : i32, i32
  }
  func.func @transform_2(%arg0: i32, %arg1: i32) -> (i32, i32) {
    %c0_i32 = arith.constant 0 : i32
    %c0_i32_0 = arith.constant 0 : i32
    %c0_i32_1 = arith.constant 0 : i32
    return %c0_i32, %c0_i32_0 : i32, i32
  }
  func.func @transform_3(%arg0: i32, %arg1: i32) -> (i32, i32) {
    %c0_i32 = arith.constant 0 : i32
    %c0_i32_0 = arith.constant 0 : i32
    %c0_i32_1 = arith.constant 0 : i32
    return %c0_i32, %c0_i32_0 : i32, i32
  }
  func.func @transform_4(%arg0: i32, %arg1: i32) -> (i32, i32) {
    %c0_i32 = arith.constant 0 : i32
    %c0_i32_0 = arith.constant 0 : i32
    return %arg0, %c0_i32 : i32, i32
  }
}

</mosaic_0001>

<llo_original>
// kernel: graph_convolution.1
$region0: #{graph_convolution.1}
  #allocation0 [shape = 'u32[]', space=smem, size = 0x4, offset = 0x4, fixed_abs, tag = 'smem constant byte address 0x4 - core index']
  #allocation1 [shape = 'u32[144,128]{1,0:T(1,128)}', space=vmem, size = 0x12000, scoped, tag = 'internal scratch']
  #allocation2 [shape = 'f32[128,64]{1,0:T(8,128)}', space=vmem, size = 0x10000, scoped, tag = 'scratch operand']
  %s0 = inlined_call_operand.hbm [shape: f32[256,256], index: 0, kind: input, shape index: {}]
  %s1 = inlined_call_operand.vmem [shape: f32[256,64], index: 1, kind: input, shape index: {}]
  %s2 = inlined_call_operand.vmem [shape: f32[64,128], index: 2, kind: input, shape index: {}]
  %s3 = inlined_call_operand.vmem [shape: f32[1,128], index: 3, kind: input, shape index: {}]
  %s4 = inlined_call_operand.hbm [shape: f32[256,128], index: 4, kind: output, shape index: {}]
  %s5 = sld [smem:[#allocation0]]
  $region61: #{graph_convolution.1} parent=0
    _
  %s7 = ssub.s32 1, %s5
  %s8 = scalar_select 0, %s7, %s5
  $region1: #{graph_convolution.1} parent=0
    #allocation3 [shape = 'u8[262144]{0}', space=vmem, size = 0x40000, scoped, tag = 'input window, operand 0']
    #allocation4 [shape = 's32[2]{0}', space=sflag, size = 0x8, scoped, tag = 'scoped memory for graph_convolution.1']
    #allocation5 [shape = 's32[2]{0}', space=sflag, size = 0x8, scoped, tag = 'scoped memory for graph_convolution.1']
    #allocation6 [shape = 'u8[131072]{0}', space=vmem, size = 0x20000, scoped, tag = 'output window, operand 0']
    %9 = vsyncpa [#allocation4], 0
    %s10 = scalar_lea.sflag [#allocation4], 1
    %11 = vsyncpa %s10, 0
    %12 = vsyncpa [#allocation5], 0
    %s13 = scalar_lea.sflag [#allocation5], 1
    %14 = vsyncpa %s13, 0
    loop: start=0, step=1, limit=4
    $region2: #{graph_convolution.1} parent=1 // loop_pre_header
      _
    $region3: #{graph_convolution.1} parent=1 // loop_header
      %s16 = sphi 0, %s20
      %p17 = scmp.ge.s32.totalorder %s16, 4
      %s23 = sphi 0, %s35
      %s24 = sphi 0, %s31
      %s25 = sphi 0, %s23
      %s26 = sphi 0, %s24
      %s27 = sphi 0, %s25
      %s28 = sphi 0, %s26
      %s40 = sphi 0, %s42
      %s43 = sphi 0, %s40
      %s44 = sphi 0, %s43
      %s60 = sphi 0, %s44
      %s66 = sphi 0, %s68
      %s69 = sphi 0, %s66
      %s70 = sphi 0, %s69
      %s86 = sphi 0, %s70
      %s90 = sphi 0, %s90
      %s92 = sphi 0, %s90
      %s93 = sphi 0, %s92
      %s107 = sphi 0, %s93
      %s111 = sphi 0, %s111
      %s113 = sphi 0, %s111
      %s114 = sphi 0, %s113
      %s128 = sphi 0, %s114
      %s134 = sphi 0, %s136
      %s137 = sphi 0, %s134
      %s138 = sphi 0, %s137
      %s154 = sphi 0, %s138
    $region4: #{graph_convolution.1} parent=1 // loop_header_branch
      %19 = sbr.rel (%p17) target = $region8
    $region5: #{graph_convolution.1} parent=1 // loop_body
      %s21 = ssub.s32 %s16, 1
      %s22 = ssub.s32 %s16, 2
      %s29 = sadd.s32 1, %s24
      %p30 = scmp.ge.s32.totalorder %s29, 1
      %s31 = scalar_select %p30, 0, %s29
      %s32 = sadd.s32 1, %s23
      %s33 = scalar_select %p30, %s32, %s23
      %p34 = scmp.ge.s32.totalorder %s33, 2
      %s35 = scalar_select %p34, 0, %s33
      %s36 = ssub.s32 %s23, %s35
      %s37 = ssub.s32 %s24, %s31
      %s38 = sor.u32 %s36, %s37
      %p39 = scmp.eq.s32.totalorder %s38, 0
      %s41 = sadd.s32 %s40, 1
      %s42 = scalar_select %p39, %s40, %s41
      %p45 = pneg %p39
      %p46 = scmp.eq.s32.totalorder %s16, 1
      %p47 = por %p45, %p46
      %p48 = scmp.ne.s32.totalorder %s40, %s43
      %p49 = scmp.eq.s32.totalorder %s16, 0
      %p50 = por %p48, %p49
      %p51 = scmp.ne.s32.totalorder %s40, %s43
      %p52 = scmp.eq.s32.totalorder %s21, 1
      %p53 = por %p51, %p52
      %p54 = scmp.ne.s32.totalorder %s43, %s44
      %p55 = scmp.eq.s32.totalorder %s21, 0
      %p56 = por %p54, %p55
      %p57 = scmp.ne.s32.totalorder %s43, %s44
      %p58 = scmp.eq.s32.totalorder %s22, 1
      %p59 = por %p57, %p58
      %p61 = scmp.ne.s32.totalorder %s44, %s60
      %p62 = scmp.eq.s32.totalorder %s22, 0
      %p63 = por %p61, %p62
      %s64 = ssub.s32 %s24, %s31
      %p65 = scmp.eq.s32.totalorder %s64, 0
      %s67 = sadd.s32 %s66, 1
      %s68 = scalar_select %p65, %s66, %s67
      %p71 = pneg %p65
      %p72 = scmp.eq.s32.totalorder %s16, 1
      %p73 = por %p71, %p72
      %p74 = scmp.ne.s32.totalorder %s66, %s69
      %p75 = scmp.eq.s32.totalorder %s16, 0
      %p76 = por %p74, %p75
      %p77 = scmp.ne.s32.totalorder %s66, %s69
      %p78 = scmp.eq.s32.totalorder %s21, 1
      %p79 = por %p77, %p78
      %p80 = scmp.ne.s32.totalorder %s69, %s70
      %p81 = scmp.eq.s32.totalorder %s21, 0
      %p82 = por %p80, %p81
      %p83 = scmp.ne.s32.totalorder %s69, %s70
      %p84 = scmp.eq.s32.totalorder %s22, 1
      %p85 = por %p83, %p84
      %p87 = scmp.ne.s32.totalorder %s70, %s86
      %p88 = scmp.eq.s32.totalorder %s22, 0
      %p89 = por %p87, %p88
      %s91 = sadd.s32 %s90, 1
      %p94 = scmp.eq.s32.totalorder %s16, 1
      %p95 = scmp.ne.s32.totalorder %s90, %s92
      %p96 = scmp.eq.s32.totalorder %s16, 0
      %p97 = por %p95, %p96
      %p98 = scmp.ne.s32.totalorder %s90, %s92
      %p99 = scmp.eq.s32.totalorder %s21, 1
      %p100 = por %p98, %p99
      %p101 = scmp.ne.s32.totalorder %s92, %s93
      %p102 = scmp.eq.s32.totalorder %s21, 0
      %p103 = por %p101, %p102
      %p104 = scmp.ne.s32.totalorder %s92, %s93
      %p105 = scmp.eq.s32.totalorder %s22, 1
      %p106 = por %p104, %p105
      %p108 = scmp.ne.s32.totalorder %s93, %s107
      %p109 = scmp.eq.s32.totalorder %s22, 0
      %p110 = por %p108, %p109
      %s112 = sadd.s32 %s111, 1
      %p115 = scmp.eq.s32.totalorder %s16, 1
      %p116 = scmp.ne.s32.totalorder %s111, %s113
      %p117 = scmp.eq.s32.totalorder %s16, 0
      %p118 = por %p116, %p117
      %p119 = scmp.ne.s32.totalorder %s111, %s113
      %p120 = scmp.eq.s32.totalorder %s21, 1
      %p121 = por %p119, %p120
      %p122 = scmp.ne.s32.totalorder %s113, %s114
      %p123 = scmp.eq.s32.totalorder %s21, 0
      %p124 = por %p122, %p123
      %p125 = scmp.ne.s32.totalorder %s113, %s114
      %p126 = scmp.eq.s32.totalorder %s22, 1
      %p127 = por %p125, %p126
      %p129 = scmp.ne.s32.totalorder %s114, %s128
      %p130 = scmp.eq.s32.totalorder %s22, 0
      %p131 = por %p129, %p130
      %s132 = ssub.s32 %s23, %s35
      %p133 = scmp.eq.s32.totalorder %s132, 0
      %s135 = sadd.s32 %s134, 1
      %s136 = scalar_select %p133, %s134, %s135
      %p139 = pneg %p133
      %p140 = scmp.eq.s32.totalorder %s16, 1
      %p141 = por %p139, %p140
      %p142 = scmp.ne.s32.totalorder %s134, %s137
      %p143 = scmp.eq.s32.totalorder %s16, 0
      %p144 = por %p142, %p143
      %p145 = scmp.ne.s32.totalorder %s134, %s137
      %p146 = scmp.eq.s32.totalorder %s21, 1
      %p147 = por %p145, %p146
      %p148 = scmp.ne.s32.totalorder %s137, %s138
      %p149 = scmp.eq.s32.totalorder %s21, 0
      %p150 = por %p148, %p149
      %p151 = scmp.ne.s32.totalorder %s137, %s138
      %p152 = scmp.eq.s32.totalorder %s22, 1
      %p153 = por %p151, %p152
      %p155 = scmp.ne.s32.totalorder %s138, %s154
      %p156 = scmp.eq.s32.totalorder %s22, 0
      %p157 = por %p155, %p156
      %p158 = scmp.le.s32.totalorder 1, %s16
      %p159 = scmp.lt.s32.totalorder %s16, 3
      %p160 = pnand %p158, %p159
      %p161 = pneg %p160
      // Predicated region
      $region9: #{graph_convolution.1} parent=5 // pred_check
        _
      $region10: #{graph_convolution.1} parent=5 // pred_check_branch
        %163 = sbr.rel (%p160) target = $region12
      $region11: #{graph_convolution.1} parent=5 // pred_region
        %s164 = ssub.s32 %s16, 1
        // Predicated region
        $region13: #{graph_convolution.1} parent=11 // pred_check
          %p165 = pneg %p82
        $region14: #{graph_convolution.1} parent=11 // pred_check_branch
          %167 = sbr.rel (%p165) target = $region16
        $region15: #{graph_convolution.1} parent=11 // pred_region
          %s168 = smul.u32 32, %s26
          %p169 = scmp.lt.s32.totalorder %s168, 31
          %s170 = scalar_select %p169, %s168, 31
          %s171 = smul.addr %s170, 8
          %s172 = scalar_lea.vmem %s1, %s171
          %s173 = smul.u32 32, %s26
        $region16: #{graph_convolution.1} parent=11 // pred_fallthru
          _
        // Predicated region
        $region17: #{graph_convolution.1} parent=11 // pred_check
          %p174 = pneg %p103
        $region18: #{graph_convolution.1} parent=11 // pred_check_branch
          %176 = sbr.rel (%p174) target = $region20
        $region19: #{graph_convolution.1} parent=11 // pred_region
          _
        $region20: #{graph_convolution.1} parent=11 // pred_fallthru
          _
        // Predicated region
        $region21: #{graph_convolution.1} parent=11 // pred_check
          %p177 = pneg %p124
        $region22: #{graph_convolution.1} parent=11 // pred_check_branch
          %179 = sbr.rel (%p177) target = $region24
        $region23: #{graph_convolution.1} parent=11 // pred_region
          _
        $region24: #{graph_convolution.1} parent=11 // pred_fallthru
          _
      $region12: #{graph_convolution.1} parent=5 // pred_fallthru
        _
      %p180 = scmp.lt.s32.totalorder %s16, 2
      // Predicated region
      $region25: #{graph_convolution.1} parent=5 // pred_check
        %p181 = pneg %p180
      $region26: #{graph_convolution.1} parent=5 // pred_check_branch
        %183 = sbr.rel (%p181) target = $region28
      $region27: #{graph_convolution.1} parent=5 // pred_region
        // Predicated region
        $region29: #{graph_convolution.1} parent=27 // pred_check
          %p184 = pneg %p50
        $region30: #{graph_convolution.1} parent=27 // pred_check_branch
          %186 = sbr.rel (%p184) target = $region32
        $region31: #{graph_convolution.1} parent=27 // pred_region
          %s187 = sand.u32 %s40, 1
          %s188 = scalar_lea.sflag [#allocation4], %s187
          %s189 = sand.u32 %s40, 1
          %s190 = smul.addr %s189, 256
          %s191 = scalar_lea.vmem [#allocation3], %s190
          %s192 = smul.u32 16, %s23
          %s193 = smul.u32 2, %s24
          %s195 = ssub.s32 4096, 4096
          %196 = vsyncadd %s188, %s195
          %s197 = smul.addr %s192, 2
          %s198 = sadd.s32 %s193, %s197
          %s199 = smul.addr %s198, 128
          %s200 = scalar_lea.hbm %s0, %s199
          %s201 = sshll.u32 %s191, 4
          %s202 = int_to_ptr.vmem [resolvable:$true] %s201
          %207 = dma.hbm_to_vmem [thread:$0]  %s200, 4096, %s202, %s188, 256, 256, 16
        $region32: #{graph_convolution.1} parent=27 // pred_fallthru
          _
      $region28: #{graph_convolution.1} parent=5 // pred_fallthru
        _
      %p208 = scmp.le.s32.totalorder 1, %s16
      %p209 = scmp.lt.s32.totalorder %s16, 3
      %p210 = pnand %p208, %p209
      %p211 = pneg %p210
      // Predicated region
      $region33: #{graph_convolution.1} parent=5 // pred_check
        _
      $region34: #{graph_convolution.1} parent=5 // pred_check_branch
        %213 = sbr.rel (%p210) target = $region36
      $region35: #{graph_convolution.1} parent=5 // pred_region
        %s214 = ssub.s32 %s16, 1
        %s215 = sand.u32 %s43, 1
        %s216 = scalar_lea.sflag [#allocation4], %s215
        %s217 = sand.u32 %s43, 1
        %s218 = smul.addr %s217, 256
        %s219 = scalar_lea.vmem [#allocation3], %s218
        // Predicated region
        $region37: #{graph_convolution.1} parent=35 // pred_check
          %p220 = pneg %p56
        $region38: #{graph_convolution.1} parent=35 // pred_check_branch
          %222 = sbr.rel (%p220) target = $region40
        $region39: #{graph_convolution.1} parent=35 // pred_region
          %223 = dma.done %s216, 4096
        $region40: #{graph_convolution.1} parent=35 // pred_fallthru
          _
        %s224 = sand.u32 %s43, 1
        %s225 = scalar_lea.sflag [#allocation4], %s224
        %s226 = sand.u32 %s43, 1
        %s227 = smul.addr %s226, 256
        %s228 = scalar_lea.vmem [#allocation3], %s227
        %p229 = pneg %p56
        %p230 = pneg %p53
        %s231 = smul.u32 32, %s26
        %p232 = scmp.lt.s32.totalorder %s231, 31
        %s233 = scalar_select %p232, %s231, 31
        %s234 = smul.addr %s233, 8
        %s235 = scalar_lea.vmem %s1, %s234
        %p236 = pneg %p82
        %p237 = pneg %p79
        %p238 = pneg %p103
        %p239 = pneg %p100
        %p240 = pneg %p124
        %p241 = pneg %p121
        %p242 = pneg %p150
        %p243 = pneg %p147
        %s244 = sand.u32 %s137, 1
        %s245 = scalar_lea.sflag [#allocation5], %s244
        %s246 = sand.u32 %s137, 1
        %s247 = smul.addr %s246, 128
        %s248 = scalar_lea.vmem [#allocation6], %s247
        %s249 = smul.u32 16, %s25
        %s250 = smul.u32 2, %s26
        %s251 = smul.u32 32, %s26
        %p252 = scmp.lt.s32.totalorder %s251, 31
        %s253 = scalar_select %p252, %s251, 31
        %s254 = smul.addr %s253, 8
        %s255 = scalar_lea.vmem %s1, %s254
        %s256 = smul.u32 32, %s26
        %s257 = smul.u32 16, %s25
        %p258 = scmp.eq.s32.totalorder %s26, 0
        // Predicated region
        $region41: #{graph_convolution.1} parent=35 // pred_check
          %p259 = pneg %p258
        $region42: #{graph_convolution.1} parent=35 // pred_check_branch
          %261 = sbr.rel (%p259) target = $region44
        $region43: #{graph_convolution.1} parent=35 // pred_region
          %vm262 = vcmask 523264
          %263 = vst.msk [vmem:[#allocation2] sm:$0xff] %vm262, 0.0
          %264 = vst.msk [vmem:[#allocation2 + $0x8] sm:$0xff] %vm262, 0.0
          %265 = vst.msk [vmem:[#allocation2 + $0x10] sm:$0xff] %vm262, 0.0
          %266 = vst.msk [vmem:[#allocation2 + $0x18] sm:$0xff] %vm262, 0.0
          %267 = vst.msk [vmem:[#allocation2 + $0x20] sm:$0xff] %vm262, 0.0
          %268 = vst.msk [vmem:[#allocation2 + $0x28] sm:$0xff] %vm262, 0.0
          %269 = vst.msk [vmem:[#allocation2 + $0x30] sm:$0xff] %vm262, 0.0
          %270 = vst.msk [vmem:[#allocation2 + $0x38] sm:$0xff] %vm262, 0.0
          %271 = vst.msk [vmem:[#allocation2 + $0x40] sm:$0xff] %vm262, 0.0
          %272 = vst.msk [vmem:[#allocation2 + $0x48] sm:$0xff] %vm262, 0.0
          %273 = vst.msk [vmem:[#allocation2 + $0x50] sm:$0xff] %vm262, 0.0
          %274 = vst.msk [vmem:[#allocation2 + $0x58] sm:$0xff] %vm262, 0.0
          %275 = vst.msk [vmem:[#allocation2 + $0x60] sm:$0xff] %vm262, 0.0
          %276 = vst.msk [vmem:[#allocation2 + $0x68] sm:$0xff] %vm262, 0.0
          %277 = vst.msk [vmem:[#allocation2 + $0x70] sm:$0xff] %vm262, 0.0
          %278 = vst.msk [vmem:[#allocation2 + $0x78] sm:$0xff] %vm262, 0.0
        $region44: #{graph_convolution.1} parent=35 // pred_fallthru
          _
        %v279 = vld [vmem:[#allocation2] sm:$0xff]
        %v280 = vld [vmem:[#allocation2 + $0x8] sm:$0xff]
        %v281 = vld [vmem:[#allocation2 + $0x10] sm:$0xff]
        %v282 = vld [vmem:[#allocation2 + $0x18] sm:$0xff]
        %v283 = vld [vmem:[#allocation2 + $0x20] sm:$0xff]
        %v284 = vld [vmem:[#allocation2 + $0x28] sm:$0xff]
        %v285 = vld [vmem:[#allocation2 + $0x30] sm:$0xff]
        %v286 = vld [vmem:[#allocation2 + $0x38] sm:$0xff]
        %v287 = vld [vmem:[#allocation2 + $0x40] sm:$0xff]
        %v288 = vld [vmem:[#allocation2 + $0x48] sm:$0xff]
        %v289 = vld [vmem:[#allocation2 + $0x50] sm:$0xff]
        %v290 = vld [vmem:[#allocation2 + $0x58] sm:$0xff]
        %v291 = vld [vmem:[#allocation2 + $0x60] sm:$0xff]
        %v292 = vld [vmem:[#allocation2 + $0x68] sm:$0xff]
        %v293 = vld [vmem:[#allocation2 + $0x70] sm:$0xff]
        %v294 = vld [vmem:[#allocation2 + $0x78] sm:$0xff]
        %v295 = vld [vmem:[%s219] sm:$0xff]
        %v296 = vld [vmem:[%s219 + $0x8] sm:$0xff]
        %v297 = vld [vmem:[%s219 + $0x10] sm:$0xff]
        %v298 = vld [vmem:[%s219 + $0x18] sm:$0xff]
        %v299 = vld [vmem:[%s219 + $0x20] sm:$0xff]
        %v300 = vld [vmem:[%s219 + $0x28] sm:$0xff]
        %v301 = vld [vmem:[%s219 + $0x30] sm:$0xff]
        %v302 = vld [vmem:[%s219 + $0x38] sm:$0xff]
        %v303 = vld [vmem:[%s219 + $0x40] sm:$0xff]
        %v304 = vld [vmem:[%s219 + $0x48] sm:$0xff]
        %v305 = vld [vmem:[%s219 + $0x50] sm:$0xff]
        %v306 = vld [vmem:[%s219 + $0x58] sm:$0xff]
        %v307 = vld [vmem:[%s219 + $0x60] sm:$0xff]
        %v308 = vld [vmem:[%s219 + $0x68] sm:$0xff]
        %v309 = vld [vmem:[%s219 + $0x70] sm:$0xff]
        %v310 = vld [vmem:[%s219 + $0x78] sm:$0xff]
        %v311 = vld [vmem:[%s219 + $0x80] sm:$0xff]
        %v312 = vld [vmem:[%s219 + $0x88] sm:$0xff]
        %v313 = vld [vmem:[%s219 + $0x90] sm:$0xff]
        %v314 = vld [vmem:[%s219 + $0x98] sm:$0xff]
        %v315 = vld [vmem:[%s219 + $0xa0] sm:$0xff]
        %v316 = vld [vmem:[%s219 + $0xa8] sm:$0xff]
        %v317 = vld [vmem:[%s219 + $0xb0] sm:$0xff]
        %v318 = vld [vmem:[%s219 + $0xb8] sm:$0xff]
        %v319 = vld [vmem:[%s219 + $0xc0] sm:$0xff]
        %v320 = vld [vmem:[%s219 + $0xc8] sm:$0xff]
        %v321 = vld [vmem:[%s219 + $0xd0] sm:$0xff]
        %v322 = vld [vmem:[%s219 + $0xd8] sm:$0xff]
        %v323 = vld [vmem:[%s219 + $0xe0] sm:$0xff]
        %v324 = vld [vmem:[%s219 + $0xe8] sm:$0xff]
        %v325 = vld [vmem:[%s219 + $0xf0] sm:$0xff]
        %v326 = vld [vmem:[%s219 + $0xf8] sm:$0xff]
        %v327 = vld [vmem:[%s255] sm:$0xff]
        %v328 = vld [vmem:[%s255 + $0x8] sm:$0xff]
        %v329 = vld [vmem:[%s255 + $0x10] sm:$0xff]
        %v330 = vld [vmem:[%s255 + $0x18] sm:$0xff]
        %v331 = vld [vmem:[%s255 + $0x20] sm:$0xff]
        %v332 = vld [vmem:[%s255 + $0x28] sm:$0xff]
        %v333 = vld [vmem:[%s255 + $0x30] sm:$0xff]
        %v334 = vld [vmem:[%s255 + $0x38] sm:$0xff]
        %v335 = vld [vmem:[%s255 + $0x40] sm:$0xff]
        %v336 = vld [vmem:[%s255 + $0x48] sm:$0xff]
        %v337 = vld [vmem:[%s255 + $0x50] sm:$0xff]
        %v338 = vld [vmem:[%s255 + $0x58] sm:$0xff]
        %v339 = vld [vmem:[%s255 + $0x60] sm:$0xff]
        %v340 = vld [vmem:[%s255 + $0x68] sm:$0xff]
        %v341 = vld [vmem:[%s255 + $0x70] sm:$0xff]
        %v342 = vld [vmem:[%s255 + $0x78] sm:$0xff]
        %v343 = vld [vmem:[%s255 + $0x80] sm:$0xff]
        %v344 = vld [vmem:[%s255 + $0x88] sm:$0xff]
        %v345 = vld [vmem:[%s255 + $0x90] sm:$0xff]
        %v346 = vld [vmem:[%s255 + $0x98] sm:$0xff]
        %v347 = vld [vmem:[%s255 + $0xa0] sm:$0xff]
        %v348 = vld [vmem:[%s255 + $0xa8] sm:$0xff]
        %v349 = vld [vmem:[%s255 + $0xb0] sm:$0xff]
        %v350 = vld [vmem:[%s255 + $0xb8] sm:$0xff]
        %v351 = vld [vmem:[%s255 + $0xc0] sm:$0xff]
        %v352 = vld [vmem:[%s255 + $0xc8] sm:$0xff]
        %v353 = vld [vmem:[%s255 + $0xd0] sm:$0xff]
        %v354 = vld [vmem:[%s255 + $0xd8] sm:$0xff]
        %v355 = vld [vmem:[%s255 + $0xe0] sm:$0xff]
        %v356 = vld [vmem:[%s255 + $0xe8] sm:$0xff]
        %v357 = vld [vmem:[%s255 + $0xf0] sm:$0xff]
        %v358 = vld [vmem:[%s255 + $0xf8] sm:$0xff]
        %359 = vmatprep.subr.mxu0 0.0
        %360 = vmatpush1.msra.mxu0 %v327
        %361 = vmatprep.subr.mxu0 0.0
        %362 = vmatpush1.msra.mxu0 %v328
        %363 = vmatprep.subr.mxu0 0.0
        %364 = vmatpush1.msra.mxu0 %v329
        %365 = vmatprep.subr.mxu0 0.0
        %366 = vmatpush1.msra.mxu0 %v330
        %367 = vmatprep.subr.mxu0 0.0
        %368 = vmatpush1.msra.mxu0 %v331
        %369 = vmatprep.subr.mxu0 0.0
        %370 = vmatpush1.msra.mxu0 %v332
        %371 = vmatprep.subr.mxu0 0.0
        %372 = vmatpush1.msra.mxu0 %v333
        %373 = vmatprep.subr.mxu0 0.0
        %374 = vmatpush1.msra.mxu0 %v334
        %375 = vmatprep.subr.mxu0 0.0
        %376 = vmatpush1.msra.mxu0 %v335
        %377 = vmatprep.subr.mxu0 0.0
        %378 = vmatpush1.msra.mxu0 %v336
        %379 = vmatprep.subr.mxu0 0.0
        %380 = vmatpush1.msra.mxu0 %v337
        %381 = vmatprep.subr.mxu0 0.0
        %382 = vmatpush1.msra.mxu0 %v338
        %383 = vmatprep.subr.mxu0 0.0
        %384 = vmatpush1.msra.mxu0 %v339
        %385 = vmatprep.subr.mxu0 0.0
        %386 = vmatpush1.msra.mxu0 %v340
        %387 = vmatprep.subr.mxu0 0.0
        %388 = vmatpush1.msra.mxu0 %v341
        %389 = vmatprep.subr.mxu0 0.0
        %390 = vmatpush1.msra.mxu0 %v342
        %391 = vmatprep.subr.mxu0 0.0
        %392 = vmatpush1.msra.mxu0 %v343
        %393 = vmatprep.subr.mxu0 0.0
        %394 = vmatpush1.msra.mxu0 %v344
        %395 = vmatprep.subr.mxu0 0.0
        %396 = vmatpush1.msra.mxu0 %v345
        %397 = vmatprep.subr.mxu0 0.0
        %398 = vmatpush1.msra.mxu0 %v346
        %399 = vmatprep.subr.mxu0 0.0
        %400 = vmatpush1.msra.mxu0 %v347
        %401 = vmatprep.subr.mxu0 0.0
        %402 = vmatpush1.msra.mxu0 %v348
        %403 = vmatprep.subr.mxu0 0.0
        %404 = vmatpush1.msra.mxu0 %v349
        %405 = vmatprep.subr.mxu0 0.0
        %406 = vmatpush1.msra.mxu0 %v350
        %407 = vmatprep.subr.mxu0 0.0
        %408 = vmatpush1.msra.mxu0 %v351
        %409 = vmatprep.subr.mxu0 0.0
        %410 = vmatpush1.msra.mxu0 %v352
        %411 = vmatprep.subr.mxu0 0.0
        %412 = vmatpush1.msra.mxu0 %v353
        %413 = vmatprep.subr.mxu0 0.0
        %414 = vmatpush1.msra.mxu0 %v354
        %415 = vmatprep.subr.mxu0 0.0
        %416 = vmatpush1.msra.mxu0 %v355
        %417 = vmatprep.subr.mxu0 0.0
        %418 = vmatpush1.msra.mxu0 %v356
        %419 = vmatprep.subr.mxu0 0.0
        %420 = vmatpush1.msra.mxu0 %v357
        %421 = vmatprep.subr.mxu0 0.0
        %422 = vmatpush1.msra.mxu0 %v358
        %423 = vmatprep.mubr.f32.mxu0 %v296
        %424 = vmatmul.mubr.f32.gmra.mrb[0].mxu0 %v295
        %v425 = vpop.f32.mrb[0].mxu0
        %v426 = vadd.f32 0.0, %v425
        %v427 = vpop.f32.mrb[0].mxu0
        %428 = vmatprep.mubr.f32.mxu0 %v298
        %429 = vmatmul.mubr.f32.gmra.mrb[0].mxu0 %v297
        %v430 = vpop.f32.mrb[0].mxu0
        %v431 = vadd.f32 0.0, %v430
        %v432 = vpop.f32.mrb[0].mxu0
        %433 = vmatprep.mubr.f32.mxu0 %v300
        %434 = vmatmul.mubr.f32.gmra.mrb[0].mxu0 %v299
        %v435 = vpop.f32.mrb[0].mxu0
        %v436 = vadd.f32 0.0, %v435
        %v437 = vpop.f32.mrb[0].mxu0
        %438 = vmatprep.mubr.f32.mxu0 %v302
        %439 = vmatmul.mubr.f32.gmra.mrb[0].mxu0 %v301
        %v440 = vpop.f32.mrb[0].mxu0
        %v441 = vadd.f32 0.0, %v440
        %v442 = vpop.f32.mrb[0].mxu0
        %443 = vmatprep.mubr.f32.mxu0 %v304
        %444 = vmatmul.mubr.f32.gmra.mrb[0].mxu0 %v303
        %v445 = vpop.f32.mrb[0].mxu0
        %v446 = vadd.f32 0.0, %v445
        %v447 = vpop.f32.mrb[0].mxu0
        %448 = vmatprep.mubr.f32.mxu0 %v306
        %449 = vmatmul.mubr.f32.gmra.mrb[0].mxu0 %v305
        %v450 = vpop.f32.mrb[0].mxu0
        %v451 = vadd.f32 0.0, %v450
        %v452 = vpop.f32.mrb[0].mxu0
        %453 = vmatprep.mubr.f32.mxu0 %v308
        %454 = vmatmul.mubr.f32.gmra.mrb[0].mxu0 %v307
        %v455 = vpop.f32.mrb[0].mxu0
        %v456 = vadd.f32 0.0, %v455
        %v457 = vpop.f32.mrb[0].mxu0
        %458 = vmatprep.mubr.f32.mxu0 %v310
        %459 = vmatmul.mubr.f32.gmra.mrb[0].mxu0 %v309
        %v460 = vpop.f32.mrb[0].mxu0
        %v461 = vadd.f32 0.0, %v460
        %v462 = vpop.f32.mrb[0].mxu0
        %463 = vmatprep.mubr.f32.mxu0 %v312
        %464 = vmatmul.mubr.f32.gmra.mrb[0].mxu0 %v311
        %v465 = vpop.f32.mrb[0].mxu0
        %v466 = vadd.f32 0.0, %v465
        %v467 = vpop.f32.mrb[0].mxu0
        %468 = vmatprep.mubr.f32.mxu0 %v314
        %469 = vmatmul.mubr.f32.gmra.mrb[0].mxu0 %v313
        %v470 = vpop.f32.mrb[0].mxu0
        %v471 = vadd.f32 0.0, %v470
        %v472 = vpop.f32.mrb[0].mxu0
        %473 = vmatprep.mubr.f32.mxu0 %v316
        %474 = vmatmul.mubr.f32.gmra.mrb[0].mxu0 %v315
        %v475 = vpop.f32.mrb[0].mxu0
        %v476 = vadd.f32 0.0, %v475
        %v477 = vpop.f32.mrb[0].mxu0
        %478 = vmatprep.mubr.f32.mxu0 %v318
        %479 = vmatmul.mubr.f32.gmra.mrb[0].mxu0 %v317
        %v480 = vpop.f32.mrb[0].mxu0
        %v481 = vadd.f32 0.0, %v480
        %v482 = vpop.f32.mrb[0].mxu0
        %483 = vmatprep.mubr.f32.mxu0 %v320
        %484 = vmatmul.mubr.f32.gmra.mrb[0].mxu0 %v319
        %v485 = vpop.f32.mrb[0].mxu0
        %v486 = vadd.f32 0.0, %v485
        %v487 = vpop.f32.mrb[0].mxu0
        %488 = vmatprep.mubr.f32.mxu0 %v322
        %489 = vmatmul.mubr.f32.gmra.mrb[0].mxu0 %v321
        %v490 = vpop.f32.mrb[0].mxu0
        %v491 = vadd.f32 0.0, %v490
        %v492 = vpop.f32.mrb[0].mxu0
        %493 = vmatprep.mubr.f32.mxu0 %v324
        %494 = vmatmul.mubr.f32.gmra.mrb[0].mxu0 %v323
        %v495 = vpop.f32.mrb[0].mxu0
        %v496 = vadd.f32 0.0, %v495
        %v497 = vpop.f32.mrb[0].mxu0
        %498 = vmatprep.mubr.f32.mxu0 %v326
        %499 = vmatmul.mubr.f32.gmra.mrb[0].mxu0 %v325
        %v500 = vpop.f32.mrb[0].mxu0
        %v501 = vadd.f32 0.0, %v500
        %v502 = vpop.f32.mrb[0].mxu0
        %503 = vdwg.mxu0
        %v504 = vadd.f32 %v279, %v426
        %v505 = vadd.f32 %v280, %v431
        %v506 = vadd.f32 %v281, %v436
        %v507 = vadd.f32 %v282, %v441
        %v508 = vadd.f32 %v283, %v446
        %v509 = vadd.f32 %v284, %v451
        %v510 = vadd.f32 %v285, %v456
        %v511 = vadd.f32 %v286, %v461
        %v512 = vadd.f32 %v287, %v466
        %v513 = vadd.f32 %v288, %v471
        %v514 = vadd.f32 %v289, %v476
        %v515 = vadd.f32 %v290, %v481
        %v516 = vadd.f32 %v291, %v486
        %v517 = vadd.f32 %v292, %v491
        %v518 = vadd.f32 %v293, %v496
        %v519 = vadd.f32 %v294, %v501
        %vm520 = vcmask 523264
        %521 = vst.msk [vmem:[#allocation2] sm:$0xff] %vm520, %v504
        %522 = vst.msk [vmem:[#allocation2 + $0x8] sm:$0xff] %vm520, %v505
        %523 = vst.msk [vmem:[#allocation2 + $0x10] sm:$0xff] %vm520, %v506
        %524 = vst.msk [vmem:[#allocation2 + $0x18] sm:$0xff] %vm520, %v507
        %525 = vst.msk [vmem:[#allocation2 + $0x20] sm:$0xff] %vm520, %v508
        %526 = vst.msk [vmem:[#allocation2 + $0x28] sm:$0xff] %vm520, %v509
        %527 = vst.msk [vmem:[#allocation2 + $0x30] sm:$0xff] %vm520, %v510
        %528 = vst.msk [vmem:[#allocation2 + $0x38] sm:$0xff] %vm520, %v511
        %529 = vst.msk [vmem:[#allocation2 + $0x40] sm:$0xff] %vm520, %v512
        %530 = vst.msk [vmem:[#allocation2 + $0x48] sm:$0xff] %vm520, %v513
        %531 = vst.msk [vmem:[#allocation2 + $0x50] sm:$0xff] %vm520, %v514
        %532 = vst.msk [vmem:[#allocation2 + $0x58] sm:$0xff] %vm520, %v515
        %533 = vst.msk [vmem:[#allocation2 + $0x60] sm:$0xff] %vm520, %v516
        %534 = vst.msk [vmem:[#allocation2 + $0x68] sm:$0xff] %vm520, %v517
        %535 = vst.msk [vmem:[#allocation2 + $0x70] sm:$0xff] %vm520, %v518
        %536 = vst.msk [vmem:[#allocation2 + $0x78] sm:$0xff] %vm520, %v519
        // Predicated region
        $region45: #{graph_convolution.1} parent=35 // pred_check
          %p537 = pneg %p258
        $region46: #{graph_convolution.1} parent=35 // pred_check_branch
          %539 = sbr.rel (%p537) target = $region48
        $region47: #{graph_convolution.1} parent=35 // pred_region
          %v540 = vld [vmem:[#allocation2] sm:$0xff]
          %v541 = vld [vmem:[#allocation2 + $0x8] sm:$0xff]
          %v542 = vld [vmem:[#allocation2 + $0x10] sm:$0xff]
          %v543 = vld [vmem:[#allocation2 + $0x18] sm:$0xff]
          %v544 = vld [vmem:[#allocation2 + $0x20] sm:$0xff]
          %v545 = vld [vmem:[#allocation2 + $0x28] sm:$0xff]
          %v546 = vld [vmem:[#allocation2 + $0x30] sm:$0xff]
          %v547 = vld [vmem:[#allocation2 + $0x38] sm:$0xff]
          %v548 = vld [vmem:[#allocation2 + $0x40] sm:$0xff]
          %v549 = vld [vmem:[#allocation2 + $0x48] sm:$0xff]
          %v550 = vld [vmem:[#allocation2 + $0x50] sm:$0xff]
          %v551 = vld [vmem:[#allocation2 + $0x58] sm:$0xff]
          %v552 = vld [vmem:[#allocation2 + $0x60] sm:$0xff]
          %v553 = vld [vmem:[#allocation2 + $0x68] sm:$0xff]
          %v554 = vld [vmem:[#allocation2 + $0x70] sm:$0xff]
          %v555 = vld [vmem:[#allocation2 + $0x78] sm:$0xff]
          %v556 = vld [vmem:[%s2] sm:$0xff]
          %v557 = vld [vmem:[%s2 + $0x8] sm:$0xff]
          %v558 = vld [vmem:[%s2 + $0x10] sm:$0xff]
          %v559 = vld [vmem:[%s2 + $0x18] sm:$0xff]
          %v560 = vld [vmem:[%s2 + $0x20] sm:$0xff]
          %v561 = vld [vmem:[%s2 + $0x28] sm:$0xff]
          %v562 = vld [vmem:[%s2 + $0x30] sm:$0xff]
          %v563 = vld [vmem:[%s2 + $0x38] sm:$0xff]
          %v564 = vld [vmem:[%s3] sm:$0x1]
          %v566 = vlaneseq
          %v567 = vshrl.u32 %v566, 7
          %v568 = vsub.s32 0, %v567
          %v569 = vrot.slane %v564, %v568
          %v572 = vsel %vm520, %v540, 0
          %v575 = vsel %vm520, %v541, 0
          %v578 = vsel %vm520, %v542, 0
          %v581 = vsel %vm520, %v543, 0
          %v584 = vsel %vm520, %v544, 0
          %v587 = vsel %vm520, %v545, 0
          %v590 = vsel %vm520, %v546, 0
          %v593 = vsel %vm520, %v547, 0
          %v596 = vsel %vm520, %v548, 0
          %v599 = vsel %vm520, %v549, 0
          %v602 = vsel %vm520, %v550, 0
          %v605 = vsel %vm520, %v551, 0
          %v608 = vsel %vm520, %v552, 0
          %v611 = vsel %vm520, %v553, 0
          %v614 = vsel %vm520, %v554, 0
          %v617 = vsel %vm520, %v555, 0
          %619 = vmatprep.subr.mxu0 0.0
          %620 = vmatpush1.msra.mxu0 %v556
          %621 = vmatprep.subr.mxu0 0.0
          %622 = vmatpush1.msra.mxu0 %v557
          %623 = vmatprep.subr.mxu0 0.0
          %624 = vmatpush1.msra.mxu0 %v558
          %625 = vmatprep.subr.mxu0 0.0
          %626 = vmatpush1.msra.mxu0 %v559
          %627 = vmatprep.subr.mxu0 0.0
          %628 = vmatpush1.msra.mxu0 %v560
          %629 = vmatprep.subr.mxu0 0.0
          %630 = vmatpush1.msra.mxu0 %v561
          %631 = vmatprep.subr.mxu0 0.0
          %632 = vmatpush1.msra.mxu0 %v562
          %633 = vmatprep.subr.mxu0 0.0
          %634 = vmatpush1.msra.mxu0 %v563
          %635 = vmatprep.subr.mxu0 0.0
          %636 = vmatpush1.msra.mxu0 0.0
          %637 = vmatprep.subr.mxu0 0.0
          %638 = vmatpush1.msra.mxu0 0.0
          %639 = vmatprep.subr.mxu0 0.0
          %640 = vmatpush1.msra.mxu0 0.0
          %641 = vmatprep.subr.mxu0 0.0
          %642 = vmatpush1.msra.mxu0 0.0
          %643 = vmatprep.subr.mxu0 0.0
          %644 = vmatpush1.msra.mxu0 0.0
          %645 = vmatprep.subr.mxu0 0.0
          %646 = vmatpush1.msra.mxu0 0.0
          %647 = vmatprep.subr.mxu0 0.0
          %648 = vmatpush1.msra.mxu0 0.0
          %649 = vmatprep.subr.mxu0 0.0
          %650 = vmatpush1.msra.mxu0 0.0
          %651 = vmatprep.subr.mxu0 0.0
          %652 = vmatpush1.msra.mxu0 0.0
          %653 = vmatprep.subr.mxu0 0.0
          %654 = vmatpush1.msra.mxu0 0.0
          %655 = vmatprep.subr.mxu0 0.0
          %656 = vmatpush1.msra.mxu0 0.0
          %657 = vmatprep.subr.mxu0 0.0
          %658 = vmatpush1.msra.mxu0 0.0
          %659 = vmatprep.subr.mxu0 0.0
          %660 = vmatpush1.msra.mxu0 0.0
          %661 = vmatprep.subr.mxu0 0.0
          %662 = vmatpush1.msra.mxu0 0.0
          %663 = vmatprep.subr.mxu0 0.0
          %664 = vmatpush1.msra.mxu0 0.0
          %665 = vmatprep.subr.mxu0 0.0
          %666 = vmatpush1.msra.mxu0 0.0
          %667 = vmatprep.subr.mxu0 0.0
          %668 = vmatpush1.msra.mxu0 0.0
          %669 = vmatprep.subr.mxu0 0.0
          %670 = vmatpush1.msra.mxu0 0.0
          %671 = vmatprep.subr.mxu0 0.0
          %672 = vmatpush1.msra.mxu0 0.0
          %673 = vmatprep.subr.mxu0 0.0
          %674 = vmatpush1.msra.mxu0 0.0
          %675 = vmatprep.subr.mxu0 0.0
          %676 = vmatpush1.msra.mxu0 0.0
          %677 = vmatprep.subr.mxu0 0.0
          %678 = vmatpush1.msra.mxu0 0.0
          %679 = vmatprep.subr.mxu0 0.0
          %680 = vmatpush1.msra.mxu0 0.0
          %681 = vmatprep.subr.mxu0 0.0
          %682 = vmatpush1.msra.mxu0 0.0
          %683 = vmatprep.mubr.f32.mxu0 0.0
          %684 = vmatmul.mubr.f32.gmra.mrb[0].mxu0 %v572
          %v685 = vpop.f32.mrb[0].mxu0
          %v686 = vadd.f32 %v569, %v685
          %v687 = vpop.f32.mrb[0].mxu0
          %688 = vmatprep.mubr.f32.mxu0 0.0
          %689 = vmatmul.mubr.f32.gmra.mrb[0].mxu0 %v575
          %v690 = vpop.f32.mrb[0].mxu0
          %v691 = vadd.f32 %v569, %v690
          %v692 = vpop.f32.mrb[0].mxu0
          %693 = vmatprep.mubr.f32.mxu0 0.0
          %694 = vmatmul.mubr.f32.gmra.mrb[0].mxu0 %v578
          %v695 = vpop.f32.mrb[0].mxu0
          %v696 = vadd.f32 %v569, %v695
          %v697 = vpop.f32.mrb[0].mxu0
          %698 = vmatprep.mubr.f32.mxu0 0.0
          %699 = vmatmul.mubr.f32.gmra.mrb[0].mxu0 %v581
          %v700 = vpop.f32.mrb[0].mxu0
          %v701 = vadd.f32 %v569, %v700
          %v702 = vpop.f32.mrb[0].mxu0
          %703 = vmatprep.mubr.f32.mxu0 0.0
          %704 = vmatmul.mubr.f32.gmra.mrb[0].mxu0 %v584
          %v705 = vpop.f32.mrb[0].mxu0
          %v706 = vadd.f32 %v569, %v705
          %v707 = vpop.f32.mrb[0].mxu0
          %708 = vmatprep.mubr.f32.mxu0 0.0
          %709 = vmatmul.mubr.f32.gmra.mrb[0].mxu0 %v587
          %v710 = vpop.f32.mrb[0].mxu0
          %v711 = vadd.f32 %v569, %v710
          %v712 = vpop.f32.mrb[0].mxu0
          %713 = vmatprep.mubr.f32.mxu0 0.0
          %714 = vmatmul.mubr.f32.gmra.mrb[0].mxu0 %v590
          %v715 = vpop.f32.mrb[0].mxu0
          %v716 = vadd.f32 %v569, %v715
          %v717 = vpop.f32.mrb[0].mxu0
          %718 = vmatprep.mubr.f32.mxu0 0.0
          %719 = vmatmul.mubr.f32.gmra.mrb[0].mxu0 %v593
          %v720 = vpop.f32.mrb[0].mxu0
          %v721 = vadd.f32 %v569, %v720
          %v722 = vpop.f32.mrb[0].mxu0
          %723 = vmatprep.mubr.f32.mxu0 0.0
          %724 = vmatmul.mubr.f32.gmra.mrb[0].mxu0 %v596
          %v725 = vpop.f32.mrb[0].mxu0
          %v726 = vadd.f32 %v569, %v725
          %v727 = vpop.f32.mrb[0].mxu0
          %728 = vmatprep.mubr.f32.mxu0 0.0
          %729 = vmatmul.mubr.f32.gmra.mrb[0].mxu0 %v599
          %v730 = vpop.f32.mrb[0].mxu0
          %v731 = vadd.f32 %v569, %v730
          %v732 = vpop.f32.mrb[0].mxu0
          %733 = vmatprep.mubr.f32.mxu0 0.0
          %734 = vmatmul.mubr.f32.gmra.mrb[0].mxu0 %v602
          %v735 = vpop.f32.mrb[0].mxu0
          %v736 = vadd.f32 %v569, %v735
          %v737 = vpop.f32.mrb[0].mxu0
          %738 = vmatprep.mubr.f32.mxu0 0.0
          %739 = vmatmul.mubr.f32.gmra.mrb[0].mxu0 %v605
          %v740 = vpop.f32.mrb[0].mxu0
          %v741 = vadd.f32 %v569, %v740
          %v742 = vpop.f32.mrb[0].mxu0
          %743 = vmatprep.mubr.f32.mxu0 0.0
          %744 = vmatmul.mubr.f32.gmra.mrb[0].mxu0 %v608
          %v745 = vpop.f32.mrb[0].mxu0
          %v746 = vadd.f32 %v569, %v745
          %v747 = vpop.f32.mrb[0].mxu0
          %748 = vmatprep.mubr.f32.mxu0 0.0
          %749 = vmatmul.mubr.f32.gmra.mrb[0].mxu0 %v611
          %v750 = vpop.f32.mrb[0].mxu0
          %v751 = vadd.f32 %v569, %v750
          %v752 = vpop.f32.mrb[0].mxu0
          %753 = vmatprep.mubr.f32.mxu0 0.0
          %754 = vmatmul.mubr.f32.gmra.mrb[0].mxu0 %v614
          %v755 = vpop.f32.mrb[0].mxu0
          %v756 = vadd.f32 %v569, %v755
          %v757 = vpop.f32.mrb[0].mxu0
          %758 = vmatprep.mubr.f32.mxu0 0.0
          %759 = vmatmul.mubr.f32.gmra.mrb[0].mxu0 %v617
          %v760 = vpop.f32.mrb[0].mxu0
          %v761 = vadd.f32 %v569, %v760
          %v762 = vpop.f32.mrb[0].mxu0
          %763 = vdwg.mxu0
          %764 = vst [vmem:[%s248] sm:$0xff] %v686
          %765 = vst [vmem:[%s248 + $0x8] sm:$0xff] %v691
          %766 = vst [vmem:[%s248 + $0x10] sm:$0xff] %v696
          %767 = vst [vmem:[%s248 + $0x18] sm:$0xff] %v701
          %768 = vst [vmem:[%s248 + $0x20] sm:$0xff] %v706
          %769 = vst [vmem:[%s248 + $0x28] sm:$0xff] %v711
          %770 = vst [vmem:[%s248 + $0x30] sm:$0xff] %v716
          %771 = vst [vmem:[%s248 + $0x38] sm:$0xff] %v721
          %772 = vst [vmem:[%s248 + $0x40] sm:$0xff] %v726
          %773 = vst [vmem:[%s248 + $0x48] sm:$0xff] %v731
          %774 = vst [vmem:[%s248 + $0x50] sm:$0xff] %v736
          %775 = vst [vmem:[%s248 + $0x58] sm:$0xff] %v741
          %776 = vst [vmem:[%s248 + $0x60] sm:$0xff] %v746
          %777 = vst [vmem:[%s248 + $0x68] sm:$0xff] %v751
          %778 = vst [vmem:[%s248 + $0x70] sm:$0xff] %v756
          %779 = vst [vmem:[%s248 + $0x78] sm:$0xff] %v761
        $region48: #{graph_convolution.1} parent=35 // pred_fallthru
          _
        %s780 = sand.u32 %s137, 1
        %s781 = scalar_lea.sflag [#allocation5], %s780
        %s782 = sand.u32 %s137, 1
        %s783 = smul.addr %s782, 128
        %s784 = scalar_lea.vmem [#allocation6], %s783
        // Predicated region
        $region49: #{graph_convolution.1} parent=35 // pred_check
          %p785 = pneg %p147
        $region50: #{graph_convolution.1} parent=35 // pred_check_branch
          %787 = sbr.rel (%p785) target = $region52
        $region51: #{graph_convolution.1} parent=35 // pred_region
          %s788 = smul.u32 16, %s25
          %s790 = ssub.s32 2048, 2048
          %791 = vsyncadd %s781, %s790
          %s792 = smul.addr %s788, 128
          %s793 = scalar_lea.hbm %s4, %s792
          %s794 = sshll.u32 %s784, 4
          %s795 = int_to_ptr.vmem [resolvable:$true] %s794
          %800 = dma.vmem_to_hbm [thread:$0]  %s795, 2048, %s793, %s781, 128, 128, 8
        $region52: #{graph_convolution.1} parent=35 // pred_fallthru
          _
      $region36: #{graph_convolution.1} parent=5 // pred_fallthru
        _
      %p801 = scmp.le.s32.totalorder 2, %s16
      // Predicated region
      $region53: #{graph_convolution.1} parent=5 // pred_check
        %p802 = pneg %p801
      $region54: #{graph_convolution.1} parent=5 // pred_check_branch
        %804 = sbr.rel (%p802) target = $region56
      $region55: #{graph_convolution.1} parent=5 // pred_region
        %s805 = ssub.s32 %s16, 2
        // Predicated region
        $region57: #{graph_convolution.1} parent=55 // pred_check
          %p806 = pneg %p153
        $region58: #{graph_convolution.1} parent=55 // pred_check_branch
          %808 = sbr.rel (%p806) target = $region60
        $region59: #{graph_convolution.1} parent=55 // pred_region
          %s809 = sand.u32 %s138, 1
          %s810 = scalar_lea.sflag [#allocation5], %s809
          %s811 = sand.u32 %s138, 1
          %s812 = smul.addr %s811, 128
          %s813 = scalar_lea.vmem [#allocation6], %s812
          %814 = dma.done %s810, 2048
        $region60: #{graph_convolution.1} parent=55 // pred_fallthru
          _
      $region56: #{graph_convolution.1} parent=5 // pred_fallthru
        _
    $region6: #{graph_convolution.1} parent=1 // loop_footer
      %s20 = sadd.s32 1, %s16
    $region7: #{graph_convolution.1} parent=1 // loop_footer_branch
      %15 = sbr.rel target = $region3
    $region8: #{graph_convolution.1} parent=1 // loop_exit
      _
    %815 = vsyncpa [#allocation4], 1
    %s816 = scalar_lea.sflag [#allocation4], 1
    %817 = vsyncpa %s816, 1
    %818 = vsyncpa [#allocation5], 1
    %s819 = scalar_lea.sflag [#allocation5], 1
    %820 = vsyncpa %s819, 1

</llo_original>
